<compile_context>
chip_gen: v5e
topology: v5e:2x2
jax: 0.10.0
libtpu: 0.0.40
codegen_flags: <defaults>
</compile_context>

<pallas_src>
import functools

import jax
import jax.numpy as jnp
from jax import lax
from jax.experimental import pallas as pl
from jax.experimental.pallas import tpu as pltpu

_LANE = 128
_NEG = -1e30
_VMEM_LIMIT = 48 * 1024 * 1024  # > 32 MiB scoped default, < v7x 64 MiB physical


def _round_up(x, m):
    return ((x + m - 1) // m) * m


def _pick_tile(npad):
    for t in (512, 256, 128):
        if npad % t == 0:
            return t
    return npad


def _pad2(a, rows, cols, dtype):
    out = jnp.pad(a, ((0, rows - a.shape[0]), (0, cols - a.shape[1])))
    return out.astype(dtype)


# ----------------------------- kernels --------------------------------------


def _transform_kernel(x_ref, w_ref, o_ref):
    # o = x @ w  (small-K feature transform, one MXU pass per row tile)
    o_ref[...] = jnp.dot(
        x_ref[...], w_ref[...], preferred_element_type=jnp.float32
    ).astype(o_ref.dtype)


def _aggregate_kernel(a_ref, m_ref, b_ref, o_ref, acc_ref):
    # o[i-tile] = relu(A[i-tile, :] @ M + b); contraction tiled over grid axis 1.
    @pl.when(pl.program_id(1) == 0)
    def _():
        acc_ref[...] = jnp.zeros_like(acc_ref)

    acc_ref[...] += jnp.dot(
        a_ref[...], m_ref[...], preferred_element_type=jnp.float32
    )

    @pl.when(pl.program_id(1) == pl.num_programs(1) - 1)
    def _():
        h = acc_ref[...] + b_ref[...]          # bias + relu fused in finalize
        o_ref[...] = jnp.maximum(h, 0.0).astype(o_ref.dtype)


def _head_kernel(p_ref, h2_ref, h1_ref, w2_ref, w1_ref, b_ref,
                 hg_ref, logp_ref, acc2_ref, acc1_ref, *, num_classes, hpad):
    # Mean pooling (contraction over node tiles) + linear head + log_softmax.
    k = pl.program_id(0)

    @pl.when(k == 0)
    def _():
        acc2_ref[...] = jnp.zeros_like(acc2_ref)
        acc1_ref[...] = jnp.zeros_like(acc1_ref)

    acc2_ref[...] += jnp.dot(
        p_ref[...], h2_ref[...], preferred_element_type=jnp.float32
    )
    acc1_ref[...] += jnp.dot(
        p_ref[...], h1_ref[...], preferred_element_type=jnp.float32
    )

    @pl.when(k == pl.num_programs(0) - 1)
    def _():
        hg2 = acc2_ref[...]
        hg1 = acc1_ref[...]
        # hG = cat(P@H2, P@H1): two lane-aligned slab stores, no XLU concat.
        hg_ref[:, :hpad] = hg2
        hg_ref[:, hpad:] = hg1
        # Split linear head: cat(hg2, hg1) @ Wlin == hg2@W_top + hg1@W_bot.
        logits = (jnp.dot(hg2, w2_ref[...], preferred_element_type=jnp.float32)
                  + jnp.dot(hg1, w1_ref[...], preferred_element_type=jnp.float32)
                  + b_ref[...])
        cls = lax.broadcasted_iota(jnp.int32, logits.shape, 1)
        logits = jnp.where(cls < num_classes, logits, _NEG)  # mask padded classes
        m = jnp.max(logits, axis=-1, keepdims=True)
        s = logits - m
        lse = jnp.log(jnp.sum(jnp.exp(s), axis=-1, keepdims=True))
        logp_ref[...] = s - lse


# --------------------------- graph glue (plain JAX) --------------------------


def normalized_adjacency(edge_index, num_nodes):
    """Dense D^-1/2 (A + I) D^-1/2 from a [2, E] edge_index (PyG gcn_norm)."""
    src, dst = edge_index[0], edge_index[1]
    a = jnp.zeros((num_nodes, num_nodes), jnp.float32).at[dst, src].add(1.0)
    a = a + jnp.eye(num_nodes, dtype=jnp.float32)  # add self-loops
    deg = jnp.sum(a, axis=1)
    dinv = jnp.where(deg > 0, lax.rsqrt(deg), 0.0)
    return dinv[:, None] * a * dinv[None, :]


def mean_pool_matrix(batch, num_graphs):
    """[G, N] matrix s.t. P @ H == global_mean_pool(H, batch)."""
    onehot = (batch[None, :] == jnp.arange(num_graphs)[:, None]).astype(jnp.float32)
    counts = jnp.sum(onehot, axis=1, keepdims=True)
    return onehot / jnp.maximum(counts, 1.0)


# ------------------------------ forward --------------------------------------


def gcn_sag_forward(x, edge_index, batch, params, num_graphs):
    n, f_in = x.shape
    dim_h = params["w1"].shape[1]
    num_classes = params["wlin"].shape[1]

    npad = _round_up(max(n, _LANE), _LANE)
    tile = _pick_tile(npad)
    fpad = _round_up(f_in, _LANE)
    hpad = _round_up(dim_h, _LANE)
    cpad = _round_up(num_classes, _LANE)
    gpad = _round_up(max(num_graphs, 16), 16)   # bf16 sublane-friendly

    # Dense, symmetric-normalized adjacency + pooling matrix (bf16: O(N^2) data).
    a_pad = _pad2(normalized_adjacency(edge_index, n), npad, npad, jnp.bfloat16)
    p_pad = _pad2(mean_pool_matrix(batch, num_graphs), gpad, npad, jnp.bfloat16)
    x_pad = _pad2(x, npad, fpad, jnp.bfloat16)

    w1 = _pad2(params["w1"], fpad, hpad, jnp.bfloat16)
    w2 = _pad2(params["w2"], hpad, hpad, jnp.bfloat16)
    b1 = _pad2(params["b1"], 1, hpad, jnp.float32)
    b2 = _pad2(params["b2"], 1, hpad, jnp.float32)
    wlin2 = _pad2(params["wlin"][:dim_h], hpad, cpad, jnp.float32)   # * H2 part
    wlin1 = _pad2(params["wlin"][dim_h:], hpad, cpad, jnp.float32)   # * H1 part
    blin = _pad2(params["blin"], 1, cpad, jnp.float32)

    n_tiles = npad // tile

    def transform(mat, w):
        return pl.pallas_call(
            _transform_kernel,
            out_shape=jax.ShapeDtypeStruct((npad, hpad), jnp.bfloat16),
            grid_spec=pltpu.PrefetchScalarGridSpec(
                num_scalar_prefetch=0,
                grid=(n_tiles,),
                in_specs=[pl.BlockSpec((tile, mat.shape[1]), lambda i: (i, 0)),
                          pl.BlockSpec((w.shape[0], hpad), lambda i: (0, 0))],
                out_specs=pl.BlockSpec((tile, hpad), lambda i: (i, 0)),
            ),
            compiler_params=pltpu.CompilerParams(
                dimension_semantics=("parallel",),
                vmem_limit_bytes=_VMEM_LIMIT),
        )(mat, w)

    aggregate = pl.pallas_call(
        _aggregate_kernel,
        out_shape=jax.ShapeDtypeStruct((npad, hpad), jnp.bfloat16),
        grid_spec=pltpu.PrefetchScalarGridSpec(
            num_scalar_prefetch=0,
            grid=(n_tiles, n_tiles),                      # (rows i, contraction k)
            in_specs=[pl.BlockSpec((tile, tile), lambda i, k: (i, k)),   # A
                      pl.BlockSpec((tile, hpad), lambda i, k: (k, 0)),   # M = X@W
                      pl.BlockSpec((1, hpad), lambda i, k: (0, 0))],     # bias
            out_specs=pl.BlockSpec((tile, hpad), lambda i, k: (i, 0)),
            scratch_shapes=[pltpu.VMEM((tile, hpad), jnp.float32)],
        ),
        compiler_params=pltpu.CompilerParams(
            dimension_semantics=("parallel", "arbitrary"),
            vmem_limit_bytes=_VMEM_LIMIT),
    )

    h1 = aggregate(a_pad, transform(x_pad, w1), b1)   # GCNConv1 + relu
    h2 = aggregate(a_pad, transform(h1, w2), b2)      # GCNConv2 + relu

    head = pl.pallas_call(
        functools.partial(_head_kernel, num_classes=num_classes, hpad=hpad),
        out_shape=(jax.ShapeDtypeStruct((gpad, 2 * hpad), jnp.float32),   # hG
                   jax.ShapeDtypeStruct((gpad, cpad), jnp.float32)),      # logp
        grid_spec=pltpu.PrefetchScalarGridSpec(
            num_scalar_prefetch=0,
            grid=(n_tiles,),                              # contraction over nodes
            in_specs=[pl.BlockSpec((gpad, tile), lambda k: (0, k)),   # P
                      pl.BlockSpec((tile, hpad), lambda k: (k, 0)),   # H2
                      pl.BlockSpec((tile, hpad), lambda k: (k, 0)),   # H1
                      pl.BlockSpec((hpad, cpad), lambda k: (0, 0)),   # Wlin (H2)
                      pl.BlockSpec((hpad, cpad), lambda k: (0, 0)),   # Wlin (H1)
                      pl.BlockSpec((1, cpad), lambda k: (0, 0))],     # blin
            out_specs=(pl.BlockSpec((gpad, 2 * hpad), lambda k: (0, 0)),
                       pl.BlockSpec((gpad, cpad), lambda k: (0, 0))),
            scratch_shapes=[pltpu.VMEM((gpad, hpad), jnp.float32),
                            pltpu.VMEM((gpad, hpad), jnp.float32)],
        ),
        compiler_params=pltpu.CompilerParams(
            dimension_semantics=("arbitrary",),
            vmem_limit_bytes=_VMEM_LIMIT),
    )
    hg_pad, logp_pad = head(p_pad, h2, h1, wlin2, wlin1, blin)

    # Strip padding outside the kernels (lane-dense slabs inside).
    hg = jnp.concatenate([hg_pad[:num_graphs, :dim_h],
                          hg_pad[:num_graphs, hpad:hpad + dim_h]], axis=-1)
    logp = logp_pad[:num_graphs, :num_classes]
    return hg, logp


# ----------------------------- reference & init ------------------------------


def reference_forward(x, edge_index, batch, params, num_graphs):
    a = normalized_adjacency(edge_index, x.shape[0])
    p = mean_pool_matrix(batch, num_graphs)
    h1 = jnp.maximum(a @ (x @ params["w1"]) + params["b1"], 0.0)
    h2 = jnp.maximum(a @ (h1 @ params["w2"]) + params["b2"], 0.0)
    hg = jnp.concatenate([p @ h2, p @ h1], axis=-1)
    logits = hg @ params["wlin"] + params["blin"]
    return hg, jax.nn.log_softmax(logits, axis=-1)


def init_params(key, num_node_features, dim_h, num_classes):
    k1, k2, k3, k4, k5, k6 = jax.random.split(key, 6)

    def glorot(k, shape):
        fan_in, fan_out = shape
        scale = jnp.sqrt(6.0 / (fan_in + fan_out))
        return jax.random.uniform(k, shape, jnp.float32, -scale, scale)

    return {
        "w1": glorot(k1, (num_node_features, dim_h)),
        "b1": 0.01 * jax.random.normal(k2, (1, dim_h), jnp.float32),
        "w2": glorot(k3, (dim_h, dim_h)),
        "b2": 0.01 * jax.random.normal(k4, (1, dim_h), jnp.float32),
        "wlin": glorot(k5, (2 * dim_h, num_classes)),
        "blin": 0.01 * jax.random.normal(k6, (1, num_classes), jnp.float32),
    }


if __name__ == "__main__":
    # Small synthetic problem: 16 nodes, 8 features, dim_h=32, 4 classes, 2 graphs.
    num_nodes = 16
    num_node_features = 8
    dim_h = 32
    num_classes = 4
    num_graphs = 2

    key = jax.random.PRNGKey(0)
    kx, kp = jax.random.split(key)
    x = jax.random.normal(kx, (num_nodes, num_node_features), jnp.float32)

    # Two ring graphs of 8 nodes each (edges stored in both directions).
    src_list, dst_list = [], []
    for g in range(num_graphs):
        base = g * 8
        for i in range(8):
            u, v = base + i, base + (i + 1) % 8
            src_list += [u, v]
            dst_list += [v, u]
    edge_index = jnp.array([src_list, dst_list], dtype=jnp.int32)
    batch = jnp.array([0] * 8 + [1] * 8, dtype=jnp.int32)

    params = init_params(kp, num_node_features, dim_h, num_classes)

    hG, logp = gcn_sag_forward(x, edge_index, batch, params, num_graphs)
    jax.block_until_ready((hG, logp))

    assert hG.shape == (num_graphs, 2 * dim_h)
    assert logp.shape == (num_graphs, num_classes)
    # log_softmax rows must sum to 1 after exp
    assert bool(jnp.allclose(jnp.sum(jnp.exp(logp), axis=1), 1.0, atol=1e-5))

    # Compare against the pure-JAX f32 reference (loose tol: bf16 adjacency path).
    hG_ref, logp_ref = reference_forward(x, edge_index, batch, params, num_graphs)
    assert bool(jnp.allclose(hG, hG_ref, atol=0.1, rtol=0.1))
    assert bool(jnp.allclose(logp, logp_ref, atol=0.1, rtol=0.1))

    print("KERNEL_OK")
</pallas_src>

<mosaic_0001>
module attributes {stable_mosaic.version = 11 : i64} {
  func.func @_transform_kernel(%arg0: i32, %arg1: memref<128x128xbf16, #tpu.memory_space<vmem>>, %arg2: memref<128x128xbf16, #tpu.memory_space<vmem>>, %arg3: memref<128x128xbf16, #tpu.memory_space<vmem>>) attributes {dimension_semantics = [#tpu.dimension_semantics<parallel>], iteration_bounds = array<i64: 1>, scalar_prefetch = 0 : i64, scratch_operands = 0 : i64, tpu.core_type = #tpu.core_type<tc>, window_params = [{transform_indices = @transform_0, window_bounds = array<i64: 128, 128>}, {pipeline_mode = #tpu.pipeline_mode<synchronous>, transform_indices = @transform_1, window_bounds = array<i64: 128, 128>}, {transform_indices = @transform_2, window_bounds = array<i64: 128, 128>}]} {
    %c0 = arith.constant 0 : index
    %c0_0 = arith.constant 0 : index
    %0 = vector.load %arg1[%c0, %c0_0] : memref<128x128xbf16, #tpu.memory_space<vmem>>, vector<128x128xbf16>
    %c0_1 = arith.constant 0 : index
    %c0_2 = arith.constant 0 : index
    %1 = vector.load %arg2[%c0_1, %c0_2] : memref<128x128xbf16, #tpu.memory_space<vmem>>, vector<128x128xbf16>
    %cst = arith.constant dense<0.000000e+00> : vector<128x128xf32>
    %2 = tpu.matmul %0, %1, %cst {dimension_numbers = #tpu.dot_dimension_numbers<[1], [0], [0], [1], [0, 0, 1, 1], [], []>} : vector<128x128xbf16>, vector<128x128xbf16>, vector<128x128xf32> -> vector<128x128xf32>
    %3 = arith.truncf %2 : vector<128x128xf32> to vector<128x128xbf16>
    %c0_3 = arith.constant 0 : index
    %c0_4 = arith.constant 0 : index
    %4 = vector.load %arg3[%c0_3, %c0_4] : memref<128x128xbf16, #tpu.memory_space<vmem>>, vector<128x128xbf16>
    tpu.vector_store %arg3[%c0_3, %c0_4], %3 {strides = array<i32>} : memref<128x128xbf16, #tpu.memory_space<vmem>>, vector<128x128xbf16>,
    return
  }
  func.func @transform_0(%arg0: i32) -> (i32, i32) {
    %c0_i32 = arith.constant 0 : i32
    %c0_i32_0 = arith.constant 0 : i32
    return %arg0, %c0_i32 : i32, i32
  }
  func.func @transform_1(%arg0: i32) -> (i32, i32) {
    %c0_i32 = arith.constant 0 : i32
    %c0_i32_0 = arith.constant 0 : i32
    %c0_i32_1 = arith.constant 0 : i32
    return %c0_i32, %c0_i32_0 : i32, i32
  }
  func.func @transform_2(%arg0: i32) -> (i32, i32) {
    %c0_i32 = arith.constant 0 : i32
    %c0_i32_0 = arith.constant 0 : i32
    return %arg0, %c0_i32 : i32, i32
  }
}

</mosaic_0001>

<llo_original>
// kernel: tpu_custom_call.1
$region0: #{tpu_custom_call.1}
  #allocation0 [shape = 'u32[]', space=smem, size = 0x4, offset = 0x4, fixed_abs, tag = 'smem constant byte address 0x4 - core index']
  #allocation1 [shape = 'u32[72,128]{1,0:T(1,128)}', space=vmem, size = 0x9000, scoped, tag = 'internal scratch']
  %s0 = inlined_call_operand.hbm [shape: bf16[128,128], index: 0, kind: input, shape index: {}]
  %s1 = inlined_call_operand.hbm [shape: bf16[128,128], index: 1, kind: input, shape index: {}]
  %s2 = inlined_call_operand.hbm [shape: bf16[128,128], index: 2, kind: output, shape index: {}]
  %s3 = sld [smem:[#allocation0]]
  $region26: #{tpu_custom_call.1} parent=0
    _
  %s5 = ssub.s32 1, %s3
  %s6 = scalar_select 0, %s5, %s3
  $region1: #{tpu_custom_call.1} parent=0
    #allocation2 [shape = 'u8[32768]{0}', space=vmem, size = 0x8000, scoped, tag = 'input window, operand 0, single buffered']
    #allocation3 [shape = 's32[1]{0}', space=sflag, size = 0x4, scoped, tag = 'scoped memory for tpu_custom_call.1']
    #allocation4 [shape = 's32[1]{0}', space=sflag, size = 0x4, scoped, tag = 'scoped memory for tpu_custom_call.1']
    #allocation5 [shape = 'u8[32768]{0}', space=vmem, size = 0x8000, scoped, tag = 'input window, operand 1, single buffered']
    #allocation6 [shape = 's32[1]{0}', space=sflag, size = 0x4, scoped, tag = 'scoped memory for tpu_custom_call.1']
    #allocation7 [shape = 'u8[32768]{0}', space=vmem, size = 0x8000, scoped, tag = 'output window, operand 0, single buffered']
    %7 = vsyncpa [#allocation3], 0
    %8 = vsyncpa [#allocation6], 0
    %9 = vsyncpa [#allocation4], 0
    // Predicated region
    $region2: #{tpu_custom_call.1} parent=1 // pred_check
      _
    $region3: #{tpu_custom_call.1} parent=1 // pred_check_branch
      %11 = sbr.rel (0) target = $region5
    $region4: #{tpu_custom_call.1} parent=1 // pred_region
      %13 = vsyncadd [#allocation3], 0
      %s14 = sshll.u32 %s0, 4
      %s15 = int_to_ptr.hbm [resolvable:$true] %s14
      %s16 = sshll.u32 [#allocation2], 4
      %s17 = int_to_ptr.vmem [resolvable:$true] %s16
      %22 = dma.hbm_to_vmem [thread:$0]  %s15, 1024, %s17, [#allocation3], 64, 64, 4
    $region5: #{tpu_custom_call.1} parent=1 // pred_fallthru
      _
    // Predicated region
    $region6: #{tpu_custom_call.1} parent=1 // pred_check
      _
    $region7: #{tpu_custom_call.1} parent=1 // pred_check_branch
      %24 = sbr.rel (0) target = $region9
    $region8: #{tpu_custom_call.1} parent=1 // pred_region
      %26 = vsyncadd [#allocation6], 0
      %s27 = sshll.u32 %s1, 4
      %s28 = int_to_ptr.hbm [resolvable:$true] %s27
      %s29 = sshll.u32 [#allocation5], 4
      %s30 = int_to_ptr.vmem [resolvable:$true] %s29
      %35 = dma.hbm_to_vmem [thread:$0]  %s28, 1024, %s30, [#allocation6], 64, 64, 4
    $region9: #{tpu_custom_call.1} parent=1 // pred_fallthru
      _
    // Predicated region
    $region10: #{tpu_custom_call.1} parent=1 // pred_check
      _
    $region11: #{tpu_custom_call.1} parent=1 // pred_check_branch
      %37 = sbr.rel (0) target = $region13
    $region12: #{tpu_custom_call.1} parent=1 // pred_region
      %39 = dma.done [#allocation3], 1024
    $region13: #{tpu_custom_call.1} parent=1 // pred_fallthru
      _
    // Predicated region
    $region14: #{tpu_custom_call.1} parent=1 // pred_check
      _
    $region15: #{tpu_custom_call.1} parent=1 // pred_check_branch
      %41 = sbr.rel (0) target = $region17
    $region16: #{tpu_custom_call.1} parent=1 // pred_region
      %43 = dma.done [#allocation6], 1024
    $region17: #{tpu_custom_call.1} parent=1 // pred_fallthru
      _
    %v44 = vld [vmem:[#allocation2] sm:$0xf]
    %v45 = vld [vmem:[#allocation2 + $0x4] sm:$0xf]
    %v46 = vld [vmem:[#allocation2 + $0x8] sm:$0xf]
    %v47 = vld [vmem:[#allocation2 + $0xc] sm:$0xf]
    %v48 = vld [vmem:[#allocation2 + $0x10] sm:$0xf]
    %v49 = vld [vmem:[#allocation2 + $0x14] sm:$0xf]
    %v50 = vld [vmem:[#allocation2 + $0x18] sm:$0xf]
    %v51 = vld [vmem:[#allocation2 + $0x1c] sm:$0xf]
    %v52 = vld [vmem:[#allocation2 + $0x20] sm:$0xf]
    %v53 = vld [vmem:[#allocation2 + $0x24] sm:$0xf]
    %v54 = vld [vmem:[#allocation2 + $0x28] sm:$0xf]
    %v55 = vld [vmem:[#allocation2 + $0x2c] sm:$0xf]
    %v56 = vld [vmem:[#allocation2 + $0x30] sm:$0xf]
    %v57 = vld [vmem:[#allocation2 + $0x34] sm:$0xf]
    %v58 = vld [vmem:[#allocation2 + $0x38] sm:$0xf]
    %v59 = vld [vmem:[#allocation2 + $0x3c] sm:$0xf]
    %v60 = vld [vmem:[#allocation5] sm:$0xf]
    %v61 = vld [vmem:[#allocation5 + $0x4] sm:$0xf]
    %v62 = vld [vmem:[#allocation5 + $0x8] sm:$0xf]
    %v63 = vld [vmem:[#allocation5 + $0xc] sm:$0xf]
    %v64 = vld [vmem:[#allocation5 + $0x10] sm:$0xf]
    %v65 = vld [vmem:[#allocation5 + $0x14] sm:$0xf]
    %v66 = vld [vmem:[#allocation5 + $0x18] sm:$0xf]
    %v67 = vld [vmem:[#allocation5 + $0x1c] sm:$0xf]
    %v68 = vld [vmem:[#allocation5 + $0x20] sm:$0xf]
    %v69 = vld [vmem:[#allocation5 + $0x24] sm:$0xf]
    %v70 = vld [vmem:[#allocation5 + $0x28] sm:$0xf]
    %v71 = vld [vmem:[#allocation5 + $0x2c] sm:$0xf]
    %v72 = vld [vmem:[#allocation5 + $0x30] sm:$0xf]
    %v73 = vld [vmem:[#allocation5 + $0x34] sm:$0xf]
    %v74 = vld [vmem:[#allocation5 + $0x38] sm:$0xf]
    %v75 = vld [vmem:[#allocation5 + $0x3c] sm:$0xf]
    %v92 = vunpack.c.l.b16 %v44
    %v93 = vunpack.c.l.b16 %v45
    %v94 = vunpack.c.l.b16 %v46
    %v95 = vunpack.c.l.b16 %v47
    %v96 = vunpack.c.l.b16 %v48
    %v97 = vunpack.c.l.b16 %v49
    %v98 = vunpack.c.l.b16 %v50
    %v99 = vunpack.c.l.b16 %v51
    %v100 = vunpack.c.l.b16 %v52
    %v101 = vunpack.c.l.b16 %v53
    %v102 = vunpack.c.l.b16 %v54
    %v103 = vunpack.c.l.b16 %v55
    %v104 = vunpack.c.l.b16 %v56
    %v105 = vunpack.c.l.b16 %v57
    %v106 = vunpack.c.l.b16 %v58
    %v107 = vunpack.c.l.b16 %v59
    %v108 = vpack.c.b16 %v93, %v92
    %v109 = vpack.c.b16 %v95, %v94
    %v110 = vpack.c.b16 %v97, %v96
    %v111 = vpack.c.b16 %v99, %v98
    %v112 = vpack.c.b16 %v101, %v100
    %v113 = vpack.c.b16 %v103, %v102
    %v114 = vpack.c.b16 %v105, %v104
    %v115 = vpack.c.b16 %v107, %v106
    %v140 = vunpack.c.l.b16 %v60
    %v141 = vunpack.c.l.b16 %v61
    %v142 = vunpack.c.l.b16 %v62
    %v143 = vunpack.c.l.b16 %v63
    %v144 = vunpack.c.l.b16 %v64
    %v145 = vunpack.c.l.b16 %v65
    %v146 = vunpack.c.l.b16 %v66
    %v147 = vunpack.c.l.b16 %v67
    %v148 = vunpack.c.l.b16 %v68
    %v149 = vunpack.c.l.b16 %v69
    %v150 = vunpack.c.l.b16 %v70
    %v151 = vunpack.c.l.b16 %v71
    %v152 = vunpack.c.l.b16 %v72
    %v153 = vunpack.c.l.b16 %v73
    %v154 = vunpack.c.l.b16 %v74
    %v155 = vunpack.c.l.b16 %v75
    %v156 = vpack.c.b16 %v141, %v140
    %v157 = vpack.c.b16 %v143, %v142
    %v158 = vpack.c.b16 %v145, %v144
    %v159 = vpack.c.b16 %v147, %v146
    %v160 = vpack.c.b16 %v149, %v148
    %v161 = vpack.c.b16 %v151, %v150
    %v162 = vpack.c.b16 %v153, %v152
    %v163 = vpack.c.b16 %v155, %v154
    %172 = vmatpush.bf16.msra.mxu0 %v163
    %173 = vmatpush.bf16.msra.mxu0 %v162
    %174 = vmatpush.bf16.msra.mxu0 %v161
    %175 = vmatpush.bf16.msra.mxu0 %v160
    %176 = vmatpush.bf16.msra.mxu0 %v159
    %177 = vmatpush.bf16.msra.mxu0 %v158
    %178 = vmatpush.bf16.msra.mxu0 %v157
    %179 = vmatpush.bf16.msra.mxu0 %v156
    %180 = vmatmul.bf16.gmra.mxu0 %v108
    %v181 = vpop.f32.mrf.mxu0
    %v182 = vadd.f32 0.0, %v181
    %v183 = vpop.f32.mrf.mxu0
    %v184 = vadd.f32 0.0, %v183
    %185 = vmatmul.bf16.gmra.mxu0 %v109
    %v186 = vpop.f32.mrf.mxu0
    %v187 = vadd.f32 0.0, %v186
    %v188 = vpop.f32.mrf.mxu0
    %v189 = vadd.f32 0.0, %v188
    %190 = vmatmul.bf16.gmra.mxu0 %v110
    %v191 = vpop.f32.mrf.mxu0
    %v192 = vadd.f32 0.0, %v191
    %v193 = vpop.f32.mrf.mxu0
    %v194 = vadd.f32 0.0, %v193
    %195 = vmatmul.bf16.gmra.mxu0 %v111
    %v196 = vpop.f32.mrf.mxu0
    %v197 = vadd.f32 0.0, %v196
    %v198 = vpop.f32.mrf.mxu0
    %v199 = vadd.f32 0.0, %v198
    %200 = vmatmul.bf16.gmra.mxu0 %v112
    %v201 = vpop.f32.mrf.mxu0
    %v202 = vadd.f32 0.0, %v201
    %v203 = vpop.f32.mrf.mxu0
    %v204 = vadd.f32 0.0, %v203
    %205 = vmatmul.bf16.gmra.mxu0 %v113
    %v206 = vpop.f32.mrf.mxu0
    %v207 = vadd.f32 0.0, %v206
    %v208 = vpop.f32.mrf.mxu0
    %v209 = vadd.f32 0.0, %v208
    %210 = vmatmul.bf16.gmra.mxu0 %v114
    %v211 = vpop.f32.mrf.mxu0
    %v212 = vadd.f32 0.0, %v211
    %v213 = vpop.f32.mrf.mxu0
    %v214 = vadd.f32 0.0, %v213
    %215 = vmatmul.bf16.gmra.mxu0 %v115
    %v216 = vpop.f32.mrf.mxu0
    %v217 = vadd.f32 0.0, %v216
    %v218 = vpop.f32.mrf.mxu0
    %v219 = vadd.f32 0.0, %v218
    %220 = vdwg.mxu0
    %v221 = vpack.c.bf16 %v182, %v182
    %v222 = vpack.c.bf16 %v184, %v184
    %v223 = vpack.c.bf16 %v187, %v187
    %v224 = vpack.c.bf16 %v189, %v189
    %v225 = vpack.c.bf16 %v192, %v192
    %v226 = vpack.c.bf16 %v194, %v194
    %v227 = vpack.c.bf16 %v197, %v197
    %v228 = vpack.c.bf16 %v199, %v199
    %v229 = vpack.c.bf16 %v202, %v202
    %v230 = vpack.c.bf16 %v204, %v204
    %v231 = vpack.c.bf16 %v207, %v207
    %v232 = vpack.c.bf16 %v209, %v209
    %v233 = vpack.c.bf16 %v212, %v212
    %v234 = vpack.c.bf16 %v214, %v214
    %v235 = vpack.c.bf16 %v217, %v217
    %v236 = vpack.c.bf16 %v219, %v219
    %237 = vst [vmem:[#allocation7] sm:$0xf] %v221
    %238 = vst [vmem:[#allocation7 + $0x4] sm:$0xf] %v222
    %239 = vst [vmem:[#allocation7 + $0x8] sm:$0xf] %v223
    %240 = vst [vmem:[#allocation7 + $0xc] sm:$0xf] %v224
    %241 = vst [vmem:[#allocation7 + $0x10] sm:$0xf] %v225
    %242 = vst [vmem:[#allocation7 + $0x14] sm:$0xf] %v226
    %243 = vst [vmem:[#allocation7 + $0x18] sm:$0xf] %v227
    %244 = vst [vmem:[#allocation7 + $0x1c] sm:$0xf] %v228
    %245 = vst [vmem:[#allocation7 + $0x20] sm:$0xf] %v229
    %246 = vst [vmem:[#allocation7 + $0x24] sm:$0xf] %v230
    %247 = vst [vmem:[#allocation7 + $0x28] sm:$0xf] %v231
    %248 = vst [vmem:[#allocation7 + $0x2c] sm:$0xf] %v232
    %249 = vst [vmem:[#allocation7 + $0x30] sm:$0xf] %v233
    %250 = vst [vmem:[#allocation7 + $0x34] sm:$0xf] %v234
    %251 = vst [vmem:[#allocation7 + $0x38] sm:$0xf] %v235
    %252 = vst [vmem:[#allocation7 + $0x3c] sm:$0xf] %v236
    // Predicated region
    $region18: #{tpu_custom_call.1} parent=1 // pred_check
      _
    $region19: #{tpu_custom_call.1} parent=1 // pred_check_branch
      %254 = sbr.rel (0) target = $region21
    $region20: #{tpu_custom_call.1} parent=1 // pred_region
      %256 = vsyncadd [#allocation4], 0
      %s257 = sshll.u32 [#allocation7], 4
      %s258 = int_to_ptr.vmem [resolvable:$true] %s257
      %s259 = sshll.u32 %s2, 4
      %s260 = int_to_ptr.hbm [resolvable:$true] %s259
      %265 = dma.vmem_to_hbm [thread:$0]  %s258, 1024, %s260, [#allocation4], 64, 64, 4
    $region21: #{tpu_custom_call.1} parent=1 // pred_fallthru
      _
    // Predicated region
    $region22: #{tpu_custom_call.1} parent=1 // pred_check
      _
    $region23: #{tpu_custom_call.1} parent=1 // pred_check_branch
      %267 = sbr.rel (0) target = $region25
    $region24: #{tpu_custom_call.1} parent=1 // pred_region
      %269 = dma.done [#allocation4], 1024
    $region25: #{tpu_custom_call.1} parent=1 // pred_fallthru
      _
    %270 = vsyncpa [#allocation3], 1
    %271 = vsyncpa [#allocation6], 1
    %272 = vsyncpa [#allocation4], 1

</llo_original>
